<compile_context>
chip_gen: v7x
topology: tpu7x:2x2x1
jax: 0.10.0
libtpu: 0.0.40
codegen_flags: <defaults>
</compile_context>

<pallas_src>
import numpy as np
import jax
import jax.numpy as jnp
from jax.experimental import pallas as pl
from jax.experimental.pallas import tpu as pltpu

_LANE = 128

# Row indices inside the packed (16, 128) f32 bias/LN/head block.
(_B0, _G0, _BE0, _B1, _G1, _BE1, _BO, _CB0, _CB1, _CW2, _CB2) = range(11)
_VEC_ROWS = 16


def _round_up(x, m):
    return (x + m - 1) // m * m


def _cdiv(a, b):
    return -(-a // b)


# ---------------------------------------------------------------------------
# Kernel (specialized to 2 hidden tower layers + 2 context layers)
# ---------------------------------------------------------------------------
def _make_kernel(h1, h2, d_out, c1, c2):
    two_h1, two_h2, two_do = 2 * h1, 2 * h2, 2 * d_out

    def kernel(x_ref, w0_ref, w1_ref, wo_ref, cup_ref, cw1_ref, vec_ref,
               out_ref):
        f32, bf16 = jnp.float32, jnp.bfloat16

        def vrow(idx, width):                       # (1, width) static slice
            return vec_ref[idx:idx + 1, :width]

        def group_mask(width, group):
            lane = jax.lax.broadcasted_iota(jnp.int32, (1, width), 1)
            m_a = (lane < group).astype(f32)
            return m_a, 1.0 - m_a

        def group_ln(x, gamma, beta, group):
            # Per-tower LayerNorm on a fused [user|place] slab of width 2*group,
            # via lane-masked reductions (biased variance, as torch).
            m_a, m_b = group_mask(x.shape[-1], group)
            inv_n = 1.0 / group
            mean_a = jnp.sum(x * m_a, axis=-1, keepdims=True) * inv_n
            mean_b = jnp.sum(x * m_b, axis=-1, keepdims=True) * inv_n
            xc = x - (mean_a * m_a + mean_b * m_b)
            sq = xc * xc
            var_a = jnp.sum(sq * m_a, axis=-1, keepdims=True) * inv_n
            var_b = jnp.sum(sq * m_b, axis=-1, keepdims=True) * inv_n
            inv = (jax.lax.rsqrt(var_a + 1e-5) * m_a          # EUP rsqrt
                   + jax.lax.rsqrt(var_b + 1e-5) * m_b)
            return xc * inv * gamma + beta

        def group_l2norm(x, group):
            # F.normalize(p=2, dim=1, eps=1e-12) per tower on the fused slab.
            m_a, m_b = group_mask(x.shape[-1], group)
            sq = x * x
            ss_a = jnp.sum(sq * m_a, axis=-1, keepdims=True)
            ss_b = jnp.sum(sq * m_b, axis=-1, keepdims=True)
            inv = (jax.lax.rsqrt(jnp.maximum(ss_a, 1e-24)) * m_a
                   + jax.lax.rsqrt(jnp.maximum(ss_b, 1e-24)) * m_b)
            return x * inv

        def bdot(a, w_ref):                          # bf16 MXU, f32 accumulate
            return jnp.dot(a.astype(bf16), w_ref[...],
                           preferred_element_type=f32)

        x = x_ref[...]                               # bf16 (tb, Din_total)

        # Fused layer 0: [user hidden | place hidden | cf @ cw0c] in one push.
        z0 = jnp.dot(x, w0_ref[...], preferred_element_type=f32)
        ctx = z0[:, two_h1:two_h1 + c1]              # cf @ cw0c   (f32)
        h = z0[:, :two_h1] + vrow(_B0, two_h1)
        h = jnp.maximum(group_ln(h, vrow(_G0, two_h1), vrow(_BE0, two_h1), h1),
                        0.0)

        # Fused layer 1.
        h = bdot(h, w1_ref) + vrow(_B1, two_h2)
        h = jnp.maximum(group_ln(h, vrow(_G1, two_h2), vrow(_BE1, two_h2), h2),
                        0.0)

        # Fused output layer -> [user_emb | place_emb], per-tower l2-normalize.
        emb = bdot(h, wo_ref) + vrow(_BO, two_do)
        emb = group_l2norm(emb, d_out)

        # Context net (ctx-feature part was pre-computed in layer 0).
        c = jnp.maximum(bdot(emb, cup_ref) + ctx + vrow(_CB0, c1), 0.0)
        c = jnp.maximum(bdot(c, cw1_ref) + vrow(_CB1, c2), 0.0)

        # Final c2 -> 1 head on the VPU (no N=1 MXU push).
        s = (jnp.sum(c * vrow(_CW2, c2), axis=-1, keepdims=True)
             + vec_ref[_CB2:_CB2 + 1, 0:1])
        out_ref[...] = s

    return kernel


# ---------------------------------------------------------------------------
# Wrapper
# ---------------------------------------------------------------------------
def two_tower_with_context(user_features, place_features, context_features,
                           params, *, block_batch=2048):
    w0, w1, wo = params["w0"], params["w1"], params["wo"]
    cup, cw1, vec = params["cup"], params["cw1"], params["vec"]
    h1, h2, d_out, c1, c2 = params["dims"]

    batch = user_features.shape[0]
    d_tot = (user_features.shape[1] + place_features.shape[1]
             + context_features.shape[1])

    # Batch tile: large (amortizes ~0.35us/step overhead), capped so that
    # (a) it never exceeds the 8-row-padded batch and (b) there are >=2 grid
    # steps when possible so v7x can shard the batch across its 2 TensorCores.
    tb = _round_up(block_batch, 128)
    tb = min(tb, _round_up(_cdiv(batch, 2), 128))
    tb = min(tb, _round_up(batch, 8))
    tb = max(tb, 8)
    num_tiles = _cdiv(batch, tb)
    b_pad = num_tiles * tb

    # One lane-dense bf16 feature stream [user | place | ctx]; no batch pad
    # (the ragged last block is handled by the Pallas pipeline).
    x = jnp.concatenate([user_features, place_features, context_features],
                        axis=1).astype(jnp.bfloat16)

    def const_spec(a):                   # weights stay VMEM-resident
        return pl.BlockSpec(a.shape, lambda i: (0, 0))

    in_specs = [pl.BlockSpec((tb, d_tot), lambda i: (i, 0)),
                const_spec(w0), const_spec(w1), const_spec(wo),
                const_spec(cup), const_spec(cw1), const_spec(vec)]
    out_spec = pl.BlockSpec((tb, 1), lambda i: (i, 0))

    macs = (d_tot * (2 * h1 + c1) + 4 * h1 * h2 + 4 * h2 * d_out
            + 2 * d_out * c1 + c1 * c2 + c2)
    cost = pl.CostEstimate(
        flops=int(2 * macs * b_pad),
        transcendentals=int(6 * b_pad),
        bytes_accessed=int(2 * x.size + 4 * b_pad + 4 * vec.size
                           + 2 * (w0.size + w1.size + wo.size
                                  + cup.size + cw1.size)))

    out = pl.pallas_call(
        _make_kernel(h1, h2, d_out, c1, c2),
        out_shape=jax.ShapeDtypeStruct((b_pad, 1), jnp.float32),
        grid=(num_tiles,),
        in_specs=in_specs,
        out_specs=out_spec,
        compiler_params=pltpu.CompilerParams(
            dimension_semantics=("parallel",)),      # v7x: batch over 2 TCs
        cost_estimate=cost,
    )(x, w0, w1, wo, cup, cw1, vec)

    return out[:batch, 0]                            # squeeze(-1) -> (batch,)


# ---------------------------------------------------------------------------
# Parameter construction (deterministic, PyTorch-default-style uniform init)
# ---------------------------------------------------------------------------
def _init_linear(key, fan_in, fan_out):
    kw, kb = jax.random.split(key)
    bound = 1.0 / float(np.sqrt(fan_in))
    w = jax.random.uniform(kw, (fan_in, fan_out), jnp.float32, -bound, bound)
    b = jax.random.uniform(kb, (fan_out,), jnp.float32, -bound, bound)
    return w, b


def make_raw_params(key, user_in, place_in, context_dim, hidden_layers,
                    output_dim, context_layers):
    assert len(hidden_layers) == 2 and len(context_layers) == 2, \
        "kernel is specialized to 2 hidden + 2 context layers"
    h1, h2 = hidden_layers
    c1, c2 = context_layers
    assert 2 * max(h1, h2, output_dim) <= _LANE and max(c1, c2) <= _LANE

    keys = iter(jax.random.split(key, 9))

    def tower(in_dim):
        w0, b0 = _init_linear(next(keys), in_dim, h1)
        w1, b1 = _init_linear(next(keys), h1, h2)
        wo, bo = _init_linear(next(keys), h2, output_dim)
        return dict(w0=w0, b0=b0, g0=jnp.ones((h1,), jnp.float32),
                    be0=jnp.zeros((h1,), jnp.float32),
                    w1=w1, b1=b1, g1=jnp.ones((h2,), jnp.float32),
                    be1=jnp.zeros((h2,), jnp.float32),
                    wo=wo, bo=bo)

    user = tower(user_in)
    place = tower(place_in)
    cw0, cb0 = _init_linear(next(keys), 2 * output_dim + context_dim, c1)
    cw1, cb1 = _init_linear(next(keys), c1, c2)
    cw2, cb2 = _init_linear(next(keys), c2, 1)
    return dict(user=user, place=place,
                cw0u=cw0[:output_dim], cw0p=cw0[output_dim:2 * output_dim],
                cw0c=cw0[2 * output_dim:], cb0=cb0,
                cw1=cw1, cb1=cb1, cw2=cw2, cb2=cb2,
                dims=(h1, h2, output_dim, c1, c2))


def pack_params(raw):
    """Build block-diagonal fused bf16 weights + packed f32 vector block."""
    h1, h2, d_out, c1, c2 = raw["dims"]
    u, p = raw["user"], raw["place"]

    def z(r, c):
        return jnp.zeros((r, c), jnp.float32)

    u_in, p_in = u["w0"].shape[0], p["w0"].shape[0]
    c_in = raw["cw0c"].shape[0]

    # Layer 0: block-diag(uw0, pw0, cw0c) -> one (Din, 2*h1 + c1) matrix.
    w0 = jnp.concatenate([
        jnp.concatenate([u["w0"], z(u_in, h1), z(u_in, c1)], axis=1),
        jnp.concatenate([z(p_in, h1), p["w0"], z(p_in, c1)], axis=1),
        jnp.concatenate([z(c_in, 2 * h1), raw["cw0c"]], axis=1),
    ], axis=0)
    w1 = jnp.concatenate([
        jnp.concatenate([u["w1"], z(h1, h2)], axis=1),
        jnp.concatenate([z(h1, h2), p["w1"]], axis=1)], axis=0)
    wo = jnp.concatenate([
        jnp.concatenate([u["wo"], z(h2, d_out)], axis=1),
        jnp.concatenate([z(h2, d_out), p["wo"]], axis=1)], axis=0)
    cup = jnp.concatenate([raw["cw0u"], raw["cw0p"]], axis=0)

    vec = jnp.zeros((_VEC_ROWS, _LANE), jnp.float32)

    def set_row(v, row, x):
        return v.at[row, :x.shape[0]].set(x.astype(jnp.float32))

    vec = set_row(vec, _B0, jnp.concatenate([u["b0"], p["b0"]]))
    vec = set_row(vec, _G0, jnp.concatenate([u["g0"], p["g0"]]))
    vec = set_row(vec, _BE0, jnp.concatenate([u["be0"], p["be0"]]))
    vec = set_row(vec, _B1, jnp.concatenate([u["b1"], p["b1"]]))
    vec = set_row(vec, _G1, jnp.concatenate([u["g1"], p["g1"]]))
    vec = set_row(vec, _BE1, jnp.concatenate([u["be1"], p["be1"]]))
    vec = set_row(vec, _BO, jnp.concatenate([u["bo"], p["bo"]]))
    vec = set_row(vec, _CB0, raw["cb0"])
    vec = set_row(vec, _CB1, raw["cb1"])
    vec = set_row(vec, _CW2, raw["cw2"][:, 0])
    vec = set_row(vec, _CB2, raw["cb2"])

    bf16 = jnp.bfloat16
    return dict(w0=w0.astype(bf16), w1=w1.astype(bf16), wo=wo.astype(bf16),
                cup=cup.astype(bf16), cw1=raw["cw1"].astype(bf16),
                vec=vec, dims=raw["dims"])


# ---------------------------------------------------------------------------
# Pure-JAX reference (torch-style formulation, bf16 matmul operands to mirror
# the kernel's MXU precision) for the correctness check
# ---------------------------------------------------------------------------
def _ref_forward(uf, pf, cf, raw):
    f32, bf16 = jnp.float32, jnp.bfloat16

    def bdot(a, w):
        return jnp.dot(a.astype(bf16), w.astype(bf16),
                       preferred_element_type=f32)

    def ln(x, g, b):
        m = jnp.mean(x, axis=-1, keepdims=True)
        v = jnp.mean((x - m) ** 2, axis=-1, keepdims=True)
        return (x - m) / jnp.sqrt(v + 1e-5) * g + b

    def l2n(x):
        n = jnp.sqrt(jnp.sum(x * x, axis=-1, keepdims=True))
        return x / jnp.maximum(n, 1e-12)

    def tower(x, t):
        h = jnp.maximum(ln(bdot(x, t["w0"]) + t["b0"], t["g0"], t["be0"]), 0.0)
        h = jnp.maximum(ln(bdot(h, t["w1"]) + t["b1"], t["g1"], t["be1"]), 0.0)
        return bdot(h, t["wo"]) + t["bo"]

    ue = l2n(tower(uf, raw["user"]))
    pe = l2n(tower(pf, raw["place"]))
    h = jnp.maximum(bdot(ue, raw["cw0u"]) + bdot(pe, raw["cw0p"])
                    + bdot(cf, raw["cw0c"]) + raw["cb0"], 0.0)
    h = jnp.maximum(bdot(h, raw["cw1"]) + raw["cb1"], 0.0)
    return jnp.sum(h * raw["cw2"][:, 0], axis=-1) + raw["cb2"][0]


# ---------------------------------------------------------------------------
# Demo
# ---------------------------------------------------------------------------
if __name__ == "__main__":
    BATCH = 8
    USER_IN, PLACE_IN, CONTEXT_DIM = 32, 48, 16
    HIDDEN_LAYERS, OUTPUT_DIM, CONTEXT_LAYERS = [64, 32], 64, [64, 32]

    root = jax.random.PRNGKey(0)
    k_u, k_p, k_c, k_params = jax.random.split(root, 4)

    user_features = jax.random.normal(k_u, (BATCH, USER_IN), jnp.float32)
    place_features = jax.random.normal(k_p, (BATCH, PLACE_IN), jnp.float32)
    context_features = jax.random.normal(k_c, (BATCH, CONTEXT_DIM), jnp.float32)

    raw = make_raw_params(k_params, USER_IN, PLACE_IN, CONTEXT_DIM,
                          HIDDEN_LAYERS, OUTPUT_DIM, CONTEXT_LAYERS)
    params = pack_params(raw)

    scores = two_tower_with_context(user_features, place_features,
                                    context_features, params)
    scores = jax.block_until_ready(scores)

    assert scores.shape == (BATCH,), scores.shape
    assert scores.dtype == jnp.float32

    ref = _ref_forward(user_features, place_features, context_features, raw)
    np.testing.assert_allclose(np.asarray(scores), np.asarray(ref),
                               rtol=1e-2, atol=1e-2)   # bf16 MXU operands

    # TODO(synk): nn.Dropout is elided (eval mode); add PRNG dropout for training.
    print("KERNEL_OK")
</pallas_src>

<mosaic_0001>
module attributes {stable_mosaic.version = 11 : i64} {
  func.func @kernel(%arg0: i32, %arg1: memref<8x96xbf16, #tpu.memory_space<vmem>>, %arg2: memref<96x192xbf16, #tpu.memory_space<vmem>>, %arg3: memref<128x64xbf16, #tpu.memory_space<vmem>>, %arg4: memref<64x128xbf16, #tpu.memory_space<vmem>>, %arg5: memref<128x64xbf16, #tpu.memory_space<vmem>>, %arg6: memref<64x32xbf16, #tpu.memory_space<vmem>>, %arg7: memref<16x128xf32, #tpu.memory_space<vmem>>, %arg8: memref<8x1xf32, #tpu.memory_space<vmem>>) attributes {dimension_semantics = [#tpu.dimension_semantics<parallel>], iteration_bounds = array<i64: 1>, scalar_prefetch = 0 : i64, scratch_operands = 0 : i64, tpu.core_type = #tpu.core_type<tc>, window_params = [{transform_indices = @transform_0, window_bounds = array<i64: 8, 96>}, {pipeline_mode = #tpu.pipeline_mode<synchronous>, transform_indices = @transform_1, window_bounds = array<i64: 96, 192>}, {pipeline_mode = #tpu.pipeline_mode<synchronous>, transform_indices = @transform_2, window_bounds = array<i64: 128, 64>}, {pipeline_mode = #tpu.pipeline_mode<synchronous>, transform_indices = @transform_3, window_bounds = array<i64: 64, 128>}, {pipeline_mode = #tpu.pipeline_mode<synchronous>, transform_indices = @transform_4, window_bounds = array<i64: 128, 64>}, {pipeline_mode = #tpu.pipeline_mode<synchronous>, transform_indices = @transform_5, window_bounds = array<i64: 64, 32>}, {pipeline_mode = #tpu.pipeline_mode<synchronous>, transform_indices = @transform_6, window_bounds = array<i64: 16, 128>}, {transform_indices = @transform_7, window_bounds = array<i64: 8, 1>}]} {
    %c0 = arith.constant 0 : index
    %c0_0 = arith.constant 0 : index
    %0 = vector.load %arg1[%c0, %c0_0] : memref<8x96xbf16, #tpu.memory_space<vmem>>, vector<8x96xbf16>
    %c0_1 = arith.constant 0 : index
    %c0_2 = arith.constant 0 : index
    %1 = vector.load %arg2[%c0_1, %c0_2] : memref<96x192xbf16, #tpu.memory_space<vmem>>, vector<96x192xbf16>
    %cst = arith.constant dense<0.000000e+00> : vector<8x192xf32>
    %2 = tpu.matmul %0, %1, %cst {dimension_numbers = #tpu.dot_dimension_numbers<[1], [0], [0], [1], [0, 0, 1, 1], [], []>} : vector<8x96xbf16>, vector<96x192xbf16>, vector<8x192xf32> -> vector<8x192xf32>
    %3 = vector.extract_strided_slice %2 {offsets = [0, 128], sizes = [8, 64], strides = [1, 1]} : vector<8x192xf32> to vector<8x64xf32>
    %4 = vector.extract_strided_slice %2 {offsets = [0, 0], sizes = [8, 128], strides = [1, 1]} : vector<8x192xf32> to vector<8x128xf32>
    %c0_3 = arith.constant 0 : index
    %c0_4 = arith.constant 0 : index
    %5 = vector.load %arg7[%c0_3, %c0_4] : memref<16x128xf32, #tpu.memory_space<vmem>>, vector<1x128xf32>
    %6 = vector.broadcast %5 : vector<1x128xf32> to vector<8x128xf32>
    %7 = arith.addf %4, %6 : vector<8x128xf32>
    %c1 = arith.constant 1 : index
    %c0_5 = arith.constant 0 : index
    %8 = vector.load %arg7[%c1, %c0_5] : memref<16x128xf32, #tpu.memory_space<vmem>>, vector<1x128xf32>
    %c2 = arith.constant 2 : index
    %c0_6 = arith.constant 0 : index
    %9 = vector.load %arg7[%c2, %c0_6] : memref<16x128xf32, #tpu.memory_space<vmem>>, vector<1x128xf32>
    %10 = tpu.iota {dimensions = array<i32: 1>} : vector<1x128xi32>
    %c64_i32 = arith.constant 64 : i32
    %11 = vector.broadcast %c64_i32 : i32 to vector<1x128xi32>
    %12 = arith.cmpi slt, %10, %11 : vector<1x128xi32>
    %13 = arith.extui %12 : vector<1x128xi1> to vector<1x128xi32>
    %14 = arith.sitofp %13 : vector<1x128xi32> to vector<1x128xf32>
    %cst_7 = arith.constant 1.000000e+00 : f32
    %15 = vector.broadcast %cst_7 : f32 to vector<1x128xf32>
    %16 = arith.subf %15, %14 : vector<1x128xf32>
    %17 = vector.broadcast %14 : vector<1x128xf32> to vector<8x128xf32>
    %18 = arith.mulf %7, %17 : vector<8x128xf32>
    %cst_8 = arith.constant dense<0.000000e+00> : vector<8xf32>
    %19 = vector.multi_reduction <add>, %18, %cst_8 [1] : vector<8x128xf32> to vector<8xf32>
    %20 = vector.shape_cast %19 : vector<8xf32> to vector<8x1xf32>
    %cst_9 = arith.constant 1.562500e-02 : f32
    %21 = vector.broadcast %cst_9 : f32 to vector<8x1xf32>
    %22 = arith.mulf %20, %21 : vector<8x1xf32>
    %23 = vector.broadcast %16 : vector<1x128xf32> to vector<8x128xf32>
    %24 = arith.mulf %7, %23 : vector<8x128xf32>
    %cst_10 = arith.constant dense<0.000000e+00> : vector<8xf32>
    %25 = vector.multi_reduction <add>, %24, %cst_10 [1] : vector<8x128xf32> to vector<8xf32>
    %26 = vector.shape_cast %25 : vector<8xf32> to vector<8x1xf32>
    %cst_11 = arith.constant 1.562500e-02 : f32
    %27 = vector.broadcast %cst_11 : f32 to vector<8x1xf32>
    %28 = arith.mulf %26, %27 : vector<8x1xf32>
    %29 = vector.broadcast %22 : vector<8x1xf32> to vector<8x128xf32>
    %30 = vector.broadcast %14 : vector<1x128xf32> to vector<8x128xf32>
    %31 = arith.mulf %29, %30 : vector<8x128xf32>
    %32 = vector.broadcast %28 : vector<8x1xf32> to vector<8x128xf32>
    %33 = vector.broadcast %16 : vector<1x128xf32> to vector<8x128xf32>
    %34 = arith.mulf %32, %33 : vector<8x128xf32>
    %35 = arith.addf %31, %34 : vector<8x128xf32>
    %36 = arith.subf %7, %35 : vector<8x128xf32>
    %37 = arith.mulf %36, %36 : vector<8x128xf32>
    %38 = vector.broadcast %14 : vector<1x128xf32> to vector<8x128xf32>
    %39 = arith.mulf %37, %38 : vector<8x128xf32>
    %cst_12 = arith.constant dense<0.000000e+00> : vector<8xf32>
    %40 = vector.multi_reduction <add>, %39, %cst_12 [1] : vector<8x128xf32> to vector<8xf32>
    %41 = vector.shape_cast %40 : vector<8xf32> to vector<8x1xf32>
    %cst_13 = arith.constant 1.562500e-02 : f32
    %42 = vector.broadcast %cst_13 : f32 to vector<8x1xf32>
    %43 = arith.mulf %41, %42 : vector<8x1xf32>
    %44 = vector.broadcast %16 : vector<1x128xf32> to vector<8x128xf32>
    %45 = arith.mulf %37, %44 : vector<8x128xf32>
    %cst_14 = arith.constant dense<0.000000e+00> : vector<8xf32>
    %46 = vector.multi_reduction <add>, %45, %cst_14 [1] : vector<8x128xf32> to vector<8xf32>
    %47 = vector.shape_cast %46 : vector<8xf32> to vector<8x1xf32>
    %cst_15 = arith.constant 1.562500e-02 : f32
    %48 = vector.broadcast %cst_15 : f32 to vector<8x1xf32>
    %49 = arith.mulf %47, %48 : vector<8x1xf32>
    %cst_16 = arith.constant 9.99999974E-6 : f32
    %50 = vector.broadcast %cst_16 : f32 to vector<8x1xf32>
    %51 = arith.addf %43, %50 : vector<8x1xf32>
    %52 = math.rsqrt %51 : vector<8x1xf32>
    %53 = vector.broadcast %52 : vector<8x1xf32> to vector<8x128xf32>
    %54 = vector.broadcast %14 : vector<1x128xf32> to vector<8x128xf32>
    %55 = arith.mulf %53, %54 : vector<8x128xf32>
    %cst_17 = arith.constant 9.99999974E-6 : f32
    %56 = vector.broadcast %cst_17 : f32 to vector<8x1xf32>
    %57 = arith.addf %49, %56 : vector<8x1xf32>
    %58 = math.rsqrt %57 : vector<8x1xf32>
    %59 = vector.broadcast %58 : vector<8x1xf32> to vector<8x128xf32>
    %60 = vector.broadcast %16 : vector<1x128xf32> to vector<8x128xf32>
    %61 = arith.mulf %59, %60 : vector<8x128xf32>
    %62 = arith.addf %55, %61 : vector<8x128xf32>
    %63 = arith.mulf %36, %62 : vector<8x128xf32>
    %64 = vector.broadcast %8 : vector<1x128xf32> to vector<8x128xf32>
    %65 = arith.mulf %63, %64 : vector<8x128xf32>
    %66 = vector.broadcast %9 : vector<1x128xf32> to vector<8x128xf32>
    %67 = arith.addf %65, %66 : vector<8x128xf32>
    %cst_18 = arith.constant 0.000000e+00 : f32
    %68 = vector.broadcast %cst_18 : f32 to vector<8x128xf32>
    %69 = arith.maximumf %67, %68 : vector<8x128xf32>
    %70 = arith.truncf %69 : vector<8x128xf32> to vector<8x128xbf16>
    %c0_19 = arith.constant 0 : index
    %c0_20 = arith.constant 0 : index
    %71 = vector.load %arg3[%c0_19, %c0_20] : memref<128x64xbf16, #tpu.memory_space<vmem>>, vector<128x64xbf16>
    %cst_21 = arith.constant dense<0.000000e+00> : vector<8x64xf32>
    %72 = tpu.matmul %70, %71, %cst_21 {dimension_numbers = #tpu.dot_dimension_numbers<[1], [0], [0], [1], [0, 0, 1, 1], [], []>} : vector<8x128xbf16>, vector<128x64xbf16>, vector<8x64xf32> -> vector<8x64xf32>
    %c3 = arith.constant 3 : index
    %c0_22 = arith.constant 0 : index
    %73 = vector.load %arg7[%c3, %c0_22] : memref<16x128xf32, #tpu.memory_space<vmem>>, vector<1x64xf32>
    %74 = vector.broadcast %73 : vector<1x64xf32> to vector<8x64xf32>
    %75 = arith.addf %72, %74 : vector<8x64xf32>
    %c4 = arith.constant 4 : index
    %c0_23 = arith.constant 0 : index
    %76 = vector.load %arg7[%c4, %c0_23] : memref<16x128xf32, #tpu.memory_space<vmem>>, vector<1x64xf32>
    %c5 = arith.constant 5 : index
    %c0_24 = arith.constant 0 : index
    %77 = vector.load %arg7[%c5, %c0_24] : memref<16x128xf32, #tpu.memory_space<vmem>>, vector<1x64xf32>
    %78 = tpu.iota {dimensions = array<i32: 1>} : vector<1x64xi32>
    %c32_i32 = arith.constant 32 : i32
    %79 = vector.broadcast %c32_i32 : i32 to vector<1x64xi32>
    %80 = arith.cmpi slt, %78, %79 : vector<1x64xi32>
    %81 = arith.extui %80 : vector<1x64xi1> to vector<1x64xi32>
    %82 = arith.sitofp %81 : vector<1x64xi32> to vector<1x64xf32>
    %cst_25 = arith.constant 1.000000e+00 : f32
    %83 = vector.broadcast %cst_25 : f32 to vector<1x64xf32>
    %84 = arith.subf %83, %82 : vector<1x64xf32>
    %85 = vector.broadcast %82 : vector<1x64xf32> to vector<8x64xf32>
    %86 = arith.mulf %75, %85 : vector<8x64xf32>
    %cst_26 = arith.constant dense<0.000000e+00> : vector<8xf32>
    %87 = vector.multi_reduction <add>, %86, %cst_26 [1] : vector<8x64xf32> to vector<8xf32>
    %88 = vector.shape_cast %87 : vector<8xf32> to vector<8x1xf32>
    %cst_27 = arith.constant 3.125000e-02 : f32
    %89 = vector.broadcast %cst_27 : f32 to vector<8x1xf32>
    %90 = arith.mulf %88, %89 : vector<8x1xf32>
    %91 = vector.broadcast %84 : vector<1x64xf32> to vector<8x64xf32>
    %92 = arith.mulf %75, %91 : vector<8x64xf32>
    %cst_28 = arith.constant dense<0.000000e+00> : vector<8xf32>
    %93 = vector.multi_reduction <add>, %92, %cst_28 [1] : vector<8x64xf32> to vector<8xf32>
    %94 = vector.shape_cast %93 : vector<8xf32> to vector<8x1xf32>
    %cst_29 = arith.constant 3.125000e-02 : f32
    %95 = vector.broadcast %cst_29 : f32 to vector<8x1xf32>
    %96 = arith.mulf %94, %95 : vector<8x1xf32>
    %97 = vector.broadcast %90 : vector<8x1xf32> to vector<8x64xf32>
    %98 = vector.broadcast %82 : vector<1x64xf32> to vector<8x64xf32>
    %99 = arith.mulf %97, %98 : vector<8x64xf32>
    %100 = vector.broadcast %96 : vector<8x1xf32> to vector<8x64xf32>
    %101 = vector.broadcast %84 : vector<1x64xf32> to vector<8x64xf32>
    %102 = arith.mulf %100, %101 : vector<8x64xf32>
    %103 = arith.addf %99, %102 : vector<8x64xf32>
    %104 = arith.subf %75, %103 : vector<8x64xf32>
    %105 = arith.mulf %104, %104 : vector<8x64xf32>
    %106 = vector.broadcast %82 : vector<1x64xf32> to vector<8x64xf32>
    %107 = arith.mulf %105, %106 : vector<8x64xf32>
    %cst_30 = arith.constant dense<0.000000e+00> : vector<8xf32>
    %108 = vector.multi_reduction <add>, %107, %cst_30 [1] : vector<8x64xf32> to vector<8xf32>
    %109 = vector.shape_cast %108 : vector<8xf32> to vector<8x1xf32>
    %cst_31 = arith.constant 3.125000e-02 : f32
    %110 = vector.broadcast %cst_31 : f32 to vector<8x1xf32>
    %111 = arith.mulf %109, %110 : vector<8x1xf32>
    %112 = vector.broadcast %84 : vector<1x64xf32> to vector<8x64xf32>
    %113 = arith.mulf %105, %112 : vector<8x64xf32>
    %cst_32 = arith.constant dense<0.000000e+00> : vector<8xf32>
    %114 = vector.multi_reduction <add>, %113, %cst_32 [1] : vector<8x64xf32> to vector<8xf32>
    %115 = vector.shape_cast %114 : vector<8xf32> to vector<8x1xf32>
    %cst_33 = arith.constant 3.125000e-02 : f32
    %116 = vector.broadcast %cst_33 : f32 to vector<8x1xf32>
    %117 = arith.mulf %115, %116 : vector<8x1xf32>
    %cst_34 = arith.constant 9.99999974E-6 : f32
    %118 = vector.broadcast %cst_34 : f32 to vector<8x1xf32>
    %119 = arith.addf %111, %118 : vector<8x1xf32>
    %120 = math.rsqrt %119 : vector<8x1xf32>
    %121 = vector.broadcast %120 : vector<8x1xf32> to vector<8x64xf32>
    %122 = vector.broadcast %82 : vector<1x64xf32> to vector<8x64xf32>
    %123 = arith.mulf %121, %122 : vector<8x64xf32>
    %cst_35 = arith.constant 9.99999974E-6 : f32
    %124 = vector.broadcast %cst_35 : f32 to vector<8x1xf32>
    %125 = arith.addf %117, %124 : vector<8x1xf32>
    %126 = math.rsqrt %125 : vector<8x1xf32>
    %127 = vector.broadcast %126 : vector<8x1xf32> to vector<8x64xf32>
    %128 = vector.broadcast %84 : vector<1x64xf32> to vector<8x64xf32>
    %129 = arith.mulf %127, %128 : vector<8x64xf32>
    %130 = arith.addf %123, %129 : vector<8x64xf32>
    %131 = arith.mulf %104, %130 : vector<8x64xf32>
    %132 = vector.broadcast %76 : vector<1x64xf32> to vector<8x64xf32>
    %133 = arith.mulf %131, %132 : vector<8x64xf32>
    %134 = vector.broadcast %77 : vector<1x64xf32> to vector<8x64xf32>
    %135 = arith.addf %133, %134 : vector<8x64xf32>
    %cst_36 = arith.constant 0.000000e+00 : f32
    %136 = vector.broadcast %cst_36 : f32 to vector<8x64xf32>
    %137 = arith.maximumf %135, %136 : vector<8x64xf32>
    %138 = arith.truncf %137 : vector<8x64xf32> to vector<8x64xbf16>
    %c0_37 = arith.constant 0 : index
    %c0_38 = arith.constant 0 : index
    %139 = vector.load %arg4[%c0_37, %c0_38] : memref<64x128xbf16, #tpu.memory_space<vmem>>, vector<64x128xbf16>
    %cst_39 = arith.constant dense<0.000000e+00> : vector<8x128xf32>
    %140 = tpu.matmul %138, %139, %cst_39 {dimension_numbers = #tpu.dot_dimension_numbers<[1], [0], [0], [1], [0, 0, 1, 1], [], []>} : vector<8x64xbf16>, vector<64x128xbf16>, vector<8x128xf32> -> vector<8x128xf32>
    %c6 = arith.constant 6 : index
    %c0_40 = arith.constant 0 : index
    %141 = vector.load %arg7[%c6, %c0_40] : memref<16x128xf32, #tpu.memory_space<vmem>>, vector<1x128xf32>
    %142 = vector.broadcast %141 : vector<1x128xf32> to vector<8x128xf32>
    %143 = arith.addf %140, %142 : vector<8x128xf32>
    %144 = tpu.iota {dimensions = array<i32: 1>} : vector<1x128xi32>
    %c64_i32_41 = arith.constant 64 : i32
    %145 = vector.broadcast %c64_i32_41 : i32 to vector<1x128xi32>
    %146 = arith.cmpi slt, %144, %145 : vector<1x128xi32>
    %147 = arith.extui %146 : vector<1x128xi1> to vector<1x128xi32>
    %148 = arith.sitofp %147 : vector<1x128xi32> to vector<1x128xf32>
    %cst_42 = arith.constant 1.000000e+00 : f32
    %149 = vector.broadcast %cst_42 : f32 to vector<1x128xf32>
    %150 = arith.subf %149, %148 : vector<1x128xf32>
    %151 = arith.mulf %143, %143 : vector<8x128xf32>
    %152 = vector.broadcast %148 : vector<1x128xf32> to vector<8x128xf32>
    %153 = arith.mulf %151, %152 : vector<8x128xf32>
    %cst_43 = arith.constant dense<0.000000e+00> : vector<8xf32>
    %154 = vector.multi_reduction <add>, %153, %cst_43 [1] : vector<8x128xf32> to vector<8xf32>
    %155 = vector.shape_cast %154 : vector<8xf32> to vector<8x1xf32>
    %156 = vector.broadcast %150 : vector<1x128xf32> to vector<8x128xf32>
    %157 = arith.mulf %151, %156 : vector<8x128xf32>
    %cst_44 = arith.constant dense<0.000000e+00> : vector<8xf32>
    %158 = vector.multi_reduction <add>, %157, %cst_44 [1] : vector<8x128xf32> to vector<8xf32>
    %159 = vector.shape_cast %158 : vector<8xf32> to vector<8x1xf32>
    %cst_45 = arith.constant 1.000000e-24 : f32
    %160 = vector.broadcast %cst_45 : f32 to vector<8x1xf32>
    %161 = arith.maximumf %155, %160 : vector<8x1xf32>
    %162 = math.rsqrt %161 : vector<8x1xf32>
    %163 = vector.broadcast %162 : vector<8x1xf32> to vector<8x128xf32>
    %164 = vector.broadcast %148 : vector<1x128xf32> to vector<8x128xf32>
    %165 = arith.mulf %163, %164 : vector<8x128xf32>
    %cst_46 = arith.constant 1.000000e-24 : f32
    %166 = vector.broadcast %cst_46 : f32 to vector<8x1xf32>
    %167 = arith.maximumf %159, %166 : vector<8x1xf32>
    %168 = math.rsqrt %167 : vector<8x1xf32>
    %169 = vector.broadcast %168 : vector<8x1xf32> to vector<8x128xf32>
    %170 = vector.broadcast %150 : vector<1x128xf32> to vector<8x128xf32>
    %171 = arith.mulf %169, %170 : vector<8x128xf32>
    %172 = arith.addf %165, %171 : vector<8x128xf32>
    %173 = arith.mulf %143, %172 : vector<8x128xf32>
    %174 = arith.truncf %173 : vector<8x128xf32> to vector<8x128xbf16>
    %c0_47 = arith.constant 0 : index
    %c0_48 = arith.constant 0 : index
    %175 = vector.load %arg5[%c0_47, %c0_48] : memref<128x64xbf16, #tpu.memory_space<vmem>>, vector<128x64xbf16>
    %cst_49 = arith.constant dense<0.000000e+00> : vector<8x64xf32>
    %176 = tpu.matmul %174, %175, %cst_49 {dimension_numbers = #tpu.dot_dimension_numbers<[1], [0], [0], [1], [0, 0, 1, 1], [], []>} : vector<8x128xbf16>, vector<128x64xbf16>, vector<8x64xf32> -> vector<8x64xf32>
    %177 = arith.addf %176, %3 : vector<8x64xf32>
    %c7 = arith.constant 7 : index
    %c0_50 = arith.constant 0 : index
    %178 = vector.load %arg7[%c7, %c0_50] : memref<16x128xf32, #tpu.memory_space<vmem>>, vector<1x64xf32>
    %179 = vector.broadcast %178 : vector<1x64xf32> to vector<8x64xf32>
    %180 = arith.addf %177, %179 : vector<8x64xf32>
    %cst_51 = arith.constant 0.000000e+00 : f32
    %181 = vector.broadcast %cst_51 : f32 to vector<8x64xf32>
    %182 = arith.maximumf %180, %181 : vector<8x64xf32>
    %183 = arith.truncf %182 : vector<8x64xf32> to vector<8x64xbf16>
    %c0_52 = arith.constant 0 : index
    %c0_53 = arith.constant 0 : index
    %184 = vector.load %arg6[%c0_52, %c0_53] : memref<64x32xbf16, #tpu.memory_space<vmem>>, vector<64x32xbf16>
    %cst_54 = arith.constant dense<0.000000e+00> : vector<8x32xf32>
    %185 = tpu.matmul %183, %184, %cst_54 {dimension_numbers = #tpu.dot_dimension_numbers<[1], [0], [0], [1], [0, 0, 1, 1], [], []>} : vector<8x64xbf16>, vector<64x32xbf16>, vector<8x32xf32> -> vector<8x32xf32>
    %c8 = arith.constant 8 : index
    %c0_55 = arith.constant 0 : index
    %186 = vector.load %arg7[%c8, %c0_55] : memref<16x128xf32, #tpu.memory_space<vmem>>, vector<1x32xf32>
    %187 = vector.broadcast %186 : vector<1x32xf32> to vector<8x32xf32>
    %188 = arith.addf %185, %187 : vector<8x32xf32>
    %cst_56 = arith.constant 0.000000e+00 : f32
    %189 = vector.broadcast %cst_56 : f32 to vector<8x32xf32>
    %190 = arith.maximumf %188, %189 : vector<8x32xf32>
    %c9 = arith.constant 9 : index
    %c0_57 = arith.constant 0 : index
    %191 = vector.load %arg7[%c9, %c0_57] : memref<16x128xf32, #tpu.memory_space<vmem>>, vector<1x32xf32>
    %192 = vector.broadcast %191 : vector<1x32xf32> to vector<8x32xf32>
    %193 = arith.mulf %190, %192 : vector<8x32xf32>
    %cst_58 = arith.constant dense<0.000000e+00> : vector<8xf32>
    %194 = vector.multi_reduction <add>, %193, %cst_58 [1] : vector<8x32xf32> to vector<8xf32>
    %195 = vector.shape_cast %194 : vector<8xf32> to vector<8x1xf32>
    %c10 = arith.constant 10 : index
    %c0_59 = arith.constant 0 : index
    %196 = vector.load %arg7[%c10, %c0_59] : memref<16x128xf32, #tpu.memory_space<vmem>>, vector<1x1xf32>
    %197 = vector.broadcast %196 : vector<1x1xf32> to vector<8x1xf32>
    %198 = arith.addf %195, %197 : vector<8x1xf32>
    %c0_60 = arith.constant 0 : index
    %c0_61 = arith.constant 0 : index
    %199 = vector.load %arg8[%c0_60, %c0_61] : memref<8x1xf32, #tpu.memory_space<vmem>>, vector<8x1xf32>
    tpu.vector_store %arg8[%c0_60, %c0_61], %198 {strides = array<i32>} : memref<8x1xf32, #tpu.memory_space<vmem>>, vector<8x1xf32>,
    return
  }
  func.func @transform_0(%arg0: i32) -> (i32, i32) {
    %c0_i32 = arith.constant 0 : i32
    %c0_i32_0 = arith.constant 0 : i32
    return %arg0, %c0_i32 : i32, i32
  }
  func.func @transform_1(%arg0: i32) -> (i32, i32) {
    %c0_i32 = arith.constant 0 : i32
    %c0_i32_0 = arith.constant 0 : i32
    %c0_i32_1 = arith.constant 0 : i32
    return %c0_i32, %c0_i32_0 : i32, i32
  }
  func.func @transform_2(%arg0: i32) -> (i32, i32) {
    %c0_i32 = arith.constant 0 : i32
    %c0_i32_0 = arith.constant 0 : i32
    %c0_i32_1 = arith.constant 0 : i32
    return %c0_i32, %c0_i32_0 : i32, i32
  }
  func.func @transform_3(%arg0: i32) -> (i32, i32) {
    %c0_i32 = arith.constant 0 : i32
    %c0_i32_0 = arith.constant 0 : i32
    %c0_i32_1 = arith.constant 0 : i32
    return %c0_i32, %c0_i32_0 : i32, i32
  }
  func.func @transform_4(%arg0: i32) -> (i32, i32) {
    %c0_i32 = arith.constant 0 : i32
    %c0_i32_0 = arith.constant 0 : i32
    %c0_i32_1 = arith.constant 0 : i32
    return %c0_i32, %c0_i32_0 : i32, i32
  }
  func.func @transform_5(%arg0: i32) -> (i32, i32) {
    %c0_i32 = arith.constant 0 : i32
    %c0_i32_0 = arith.constant 0 : i32
    %c0_i32_1 = arith.constant 0 : i32
    return %c0_i32, %c0_i32_0 : i32, i32
  }
  func.func @transform_6(%arg0: i32) -> (i32, i32) {
    %c0_i32 = arith.constant 0 : i32
    %c0_i32_0 = arith.constant 0 : i32
    %c0_i32_1 = arith.constant 0 : i32
    return %c0_i32, %c0_i32_0 : i32, i32
  }
  func.func @transform_7(%arg0: i32) -> (i32, i32) {
    %c0_i32 = arith.constant 0 : i32
    %c0_i32_0 = arith.constant 0 : i32
    return %arg0, %c0_i32 : i32, i32
  }
}

</mosaic_0001>

<llo_original>
// kernel: tpu_custom_call.1
$region0: #{tpu_custom_call.1}
  #allocation0 [shape = 'u32[]', space=smem, size = 0x4, offset = 0x4, fixed_abs, tag = 'smem constant byte address 0x4 - core index']
  #allocation1 [shape = 'u32[144,128]{1,0:T(1,128)}', space=vmem, size = 0x12000, scoped, tag = 'internal scratch']
  %s0 = inlined_call_operand.vmem [shape: bf16[8,96], index: 0, kind: input, shape index: {}]
  %s1 = inlined_call_operand.vmem [shape: bf16[96,192], index: 1, kind: input, shape index: {}]
  %s2 = inlined_call_operand.vmem [shape: bf16[128,64], index: 2, kind: input, shape index: {}]
  %s3 = inlined_call_operand.vmem [shape: bf16[64,128], index: 3, kind: input, shape index: {}]
  %s4 = inlined_call_operand.vmem [shape: bf16[128,64], index: 4, kind: input, shape index: {}]
  %s5 = inlined_call_operand.vmem [shape: bf16[64,32], index: 5, kind: input, shape index: {}]
  %s6 = inlined_call_operand.vmem [shape: f32[16,128], index: 6, kind: input, shape index: {}]
  %s7 = inlined_call_operand.vmem [shape: f32[8,1], index: 7, kind: output, shape index: {}]
  %s8 = sld [smem:[#allocation0]]
  $region38: #{tpu_custom_call.1} parent=0
    _
  %s10 = ssub.s32 1, %s8
  %s11 = scalar_select 0, %s10, %s8
  // Predicated region
  $region2: #{tpu_custom_call.1} parent=0 // pred_check
    _
  $region3: #{tpu_custom_call.1} parent=0 // pred_check_branch
    %13 = sbr.rel (0) target = $region5
  $region4: #{tpu_custom_call.1} parent=0 // pred_region
    _
  $region5: #{tpu_custom_call.1} parent=0 // pred_fallthru
    _
  // Predicated region
  $region6: #{tpu_custom_call.1} parent=0 // pred_check
    _
  $region7: #{tpu_custom_call.1} parent=0 // pred_check_branch
    %15 = sbr.rel (0) target = $region9
  $region8: #{tpu_custom_call.1} parent=0 // pred_region
    _
  $region9: #{tpu_custom_call.1} parent=0 // pred_fallthru
    _
  // Predicated region
  $region10: #{tpu_custom_call.1} parent=0 // pred_check
    _
  $region11: #{tpu_custom_call.1} parent=0 // pred_check_branch
    %17 = sbr.rel (0) target = $region13
  $region12: #{tpu_custom_call.1} parent=0 // pred_region
    _
  $region13: #{tpu_custom_call.1} parent=0 // pred_fallthru
    _
  // Predicated region
  $region14: #{tpu_custom_call.1} parent=0 // pred_check
    _
  $region15: #{tpu_custom_call.1} parent=0 // pred_check_branch
    %19 = sbr.rel (0) target = $region17
  $region16: #{tpu_custom_call.1} parent=0 // pred_region
    _
  $region17: #{tpu_custom_call.1} parent=0 // pred_fallthru
    _
  // Predicated region
  $region18: #{tpu_custom_call.1} parent=0 // pred_check
    _
  $region19: #{tpu_custom_call.1} parent=0 // pred_check_branch
    %21 = sbr.rel (0) target = $region21
  $region20: #{tpu_custom_call.1} parent=0 // pred_region
    _
  $region21: #{tpu_custom_call.1} parent=0 // pred_fallthru
    _
  // Predicated region
  $region22: #{tpu_custom_call.1} parent=0 // pred_check
    _
  $region23: #{tpu_custom_call.1} parent=0 // pred_check_branch
    %23 = sbr.rel (0) target = $region25
  $region24: #{tpu_custom_call.1} parent=0 // pred_region
    _
  $region25: #{tpu_custom_call.1} parent=0 // pred_fallthru
    _
  // Predicated region
  $region26: #{tpu_custom_call.1} parent=0 // pred_check
    _
  $region27: #{tpu_custom_call.1} parent=0 // pred_check_branch
    %25 = sbr.rel (0) target = $region29
  $region28: #{tpu_custom_call.1} parent=0 // pred_region
    _
  $region29: #{tpu_custom_call.1} parent=0 // pred_fallthru
    _
  %v27 = vld [vmem:[%s0] sm:$0xf]
  %v28 = vld [vmem:[%s1] sm:$0xff]
  %v29 = vld [vmem:[%s1 + $0x8] sm:$0xff]
  %v30 = vld [vmem:[%s1 + $0x10] sm:$0xff]
  %v31 = vld [vmem:[%s1 + $0x18] sm:$0xff]
  %v32 = vld [vmem:[%s1 + $0x20] sm:$0xff]
  %v33 = vld [vmem:[%s1 + $0x28] sm:$0xff]
  %v34 = vld [vmem:[%s1 + $0x30] sm:$0xff]
  %v35 = vld [vmem:[%s1 + $0x38] sm:$0xff]
  %v36 = vld [vmem:[%s1 + $0x40] sm:$0xff]
  %v37 = vld [vmem:[%s1 + $0x48] sm:$0xff]
  %v38 = vld [vmem:[%s1 + $0x50] sm:$0xff]
  %v39 = vld [vmem:[%s1 + $0x58] sm:$0xff]
  %v52 = vunpack.c.l.b16 %v28
  %v53 = vunpack.c.h.b16 %v28
  %v54 = vunpack.c.l.b16 %v29
  %v55 = vunpack.c.h.b16 %v29
  %v56 = vunpack.c.l.b16 %v30
  %v57 = vunpack.c.h.b16 %v30
  %v58 = vunpack.c.l.b16 %v31
  %v59 = vunpack.c.h.b16 %v31
  %v60 = vunpack.c.l.b16 %v32
  %v61 = vunpack.c.h.b16 %v32
  %v62 = vunpack.c.l.b16 %v33
  %v63 = vunpack.c.h.b16 %v33
  %v64 = vunpack.c.l.b16 %v34
  %v65 = vunpack.c.h.b16 %v34
  %v66 = vunpack.c.l.b16 %v35
  %v67 = vunpack.c.h.b16 %v35
  %v68 = vunpack.c.l.b16 %v36
  %v69 = vunpack.c.h.b16 %v36
  %v70 = vunpack.c.l.b16 %v37
  %v71 = vunpack.c.h.b16 %v37
  %v72 = vunpack.c.l.b16 %v38
  %v73 = vunpack.c.h.b16 %v38
  %v74 = vunpack.c.l.b16 %v39
  %v75 = vunpack.c.h.b16 %v39
  %v76 = vpack.c.b16 %v54, %v52
  %v77 = vpack.c.b16 %v55, %v53
  %v78 = vpack.c.b16 %v58, %v56
  %v79 = vpack.c.b16 %v59, %v57
  %v80 = vpack.c.b16 %v62, %v60
  %v81 = vpack.c.b16 %v63, %v61
  %v82 = vpack.c.b16 %v66, %v64
  %v83 = vpack.c.b16 %v67, %v65
  %v84 = vpack.c.b16 %v70, %v68
  %v85 = vpack.c.b16 %v71, %v69
  %v86 = vpack.c.b16 %v74, %v72
  %v87 = vpack.c.b16 %v75, %v73
  %vm100 = vcmask 785408
  %v102 = vsel %vm100, %v27, 0
  %104 = vmatprep.subr.bf16.mxu0 %v77
  %105 = vmatpush1.bf16.msra.mxu0 %v76
  %106 = vmatprep.subr.bf16.mxu0 %v79
  %107 = vmatpush1.bf16.msra.mxu0 %v78
  %108 = vmatprep.subr.bf16.mxu0 %v81
  %109 = vmatpush1.bf16.msra.mxu0 %v80
  %110 = vmatprep.subr.bf16.mxu0 %v83
  %111 = vmatpush1.bf16.msra.mxu0 %v82
  %112 = vmatprep.subr.bf16.mxu0 %v85
  %113 = vmatpush1.bf16.msra.mxu0 %v84
  %114 = vmatprep.subr.bf16.mxu0 %v87
  %115 = vmatpush1.bf16.msra.mxu0 %v86
  %116 = vmatprep.subr.bf16.mxu0 0
  %117 = vmatpush1.bf16.msra.mxu0 0
  %118 = vmatprep.subr.bf16.mxu0 0
  %119 = vmatpush1.bf16.msra.mxu0 0
  %120 = vmatprep.subr.bf16.mxu0 0
  %121 = vmatpush1.bf16.msra.mxu0 0
  %122 = vmatprep.subr.bf16.mxu0 0
  %123 = vmatpush1.bf16.msra.mxu0 0
  %124 = vmatprep.subr.bf16.mxu0 0
  %125 = vmatpush1.bf16.msra.mxu0 0
  %126 = vmatprep.subr.bf16.mxu0 0
  %127 = vmatpush1.bf16.msra.mxu0 0
  %128 = vmatprep.subr.bf16.mxu0 0
  %129 = vmatpush1.bf16.msra.mxu0 0
  %130 = vmatprep.subr.bf16.mxu0 0
  %131 = vmatpush1.bf16.msra.mxu0 0
  %132 = vmatprep.subr.bf16.mxu0 0
  %133 = vmatpush1.bf16.msra.mxu0 0
  %134 = vmatprep.subr.bf16.mxu0 0
  %135 = vmatpush1.bf16.msra.mxu0 0
  %136 = vmatprep.mubr.bf16.mxu0 0
  %137 = vmatmul.mubr.bf16.gmra.mrb[0].mxu0 %v102
  %v138 = vpop.f32.mrb[0].mxu0
  %v139 = vadd.f32 0.0, %v138
  %v140 = vpop.f32.mrb[0].mxu0
  %v141 = vadd.f32 0.0, %v140
  %v142 = vpop.f32.mrb[0].mxu0
  %v143 = vpop.f32.mrb[0].mxu0
  %144 = vdwg.mxu0
  %v145 = vld [vmem:[%s6] sm:$0x1]
  %v146 = vlaneseq
  %v147 = vshrl.u32 %v146, 7
  %v148 = vsub.s32 0, %v147
  %v149 = vrot.slane %v145, %v148
  %v150 = vadd.f32 %v139, %v149
  %v151 = vld [vmem:[%s6 + $0x1] sm:$0x1]
  %v152 = vld [vmem:[%s6 + $0x2] sm:$0x1]
  %v153 = vlaneseq
  %v154 = vand.u32 %v153, 127
  %vm155 = vcmp.lt.s32.totalorder %v154, 64
  %v156 = vsel %vm155, 1, 0
  %v157 = vcvt.s32.f32 %v156
  %v158 = vsub.f32 1.0, %v157
  %v159 = vmul.f32 %v150, %v157
  %160 = vadd.xlane.f32.xlu0 %v159
  %v161 = vpop.xlane.xlu0 %160
  %v162 = vmul.f32 %v161, 0.015625
  %v163 = vmul.f32 %v150, %v158
  %164 = vadd.xlane.f32.xlu0 %v163
  %v165 = vpop.xlane.xlu0 %164
  %v166 = vmul.f32 %v165, 0.015625
  %v167 = vmul.f32 %v162, %v157
  %v168 = vmul.f32 %v166, %v158
  %v169 = vadd.f32 %v167, %v168
  %v170 = vsub.f32 %v150, %v169
  %v171 = vmul.f32 %v170, %v170
  %v172 = vmul.f32 %v171, %v157
  %173 = vadd.xlane.f32.xlu0 %v172
  %v174 = vpop.xlane.xlu0 %173
  %v175 = vmul.f32 %v174, 0.015625
  %v176 = vmul.f32 %v171, %v158
  %177 = vadd.xlane.f32.xlu0 %v176
  %v178 = vpop.xlane.xlu0 %177
  %v179 = vmul.f32 %v178, 0.015625
  %v180 = vadd.f32 %v175, 1e-05
  %v181 = vrsqrt.pop %v180
  %v182 = vmul.f32 %v181, %v157
  %v183 = vadd.f32 %v179, 1e-05
  %v184 = vrsqrt.pop %v183
  %v185 = vmul.f32 %v184, %v158
  %v186 = vadd.f32 %v182, %v185
  %v187 = vmul.f32 %v170, %v186
  %v188 = vlaneseq
  %v189 = vshrl.u32 %v188, 7
  %v190 = vsub.s32 0, %v189
  %v191 = vrot.slane %v151, %v190
  %v192 = vmul.f32 %v187, %v191
  %v193 = vlaneseq
  %v194 = vshrl.u32 %v193, 7
  %v195 = vsub.s32 0, %v194
  %v196 = vrot.slane %v152, %v195
  %v197 = vadd.f32 %v192, %v196
  %v198 = vmax.f32 %v197, 0.0
  %v199 = vpack.c.bf16 %v198, %v198
  %v200 = vld [vmem:[%s2] sm:$0xf]
  %v201 = vld [vmem:[%s2 + $0x4] sm:$0xf]
  %v202 = vld [vmem:[%s2 + $0x8] sm:$0xf]
  %v203 = vld [vmem:[%s2 + $0xc] sm:$0xf]
  %v204 = vld [vmem:[%s2 + $0x10] sm:$0xf]
  %v205 = vld [vmem:[%s2 + $0x14] sm:$0xf]
  %v206 = vld [vmem:[%s2 + $0x18] sm:$0xf]
  %v207 = vld [vmem:[%s2 + $0x1c] sm:$0xf]
  %v208 = vld [vmem:[%s2 + $0x20] sm:$0xf]
  %v209 = vld [vmem:[%s2 + $0x24] sm:$0xf]
  %v210 = vld [vmem:[%s2 + $0x28] sm:$0xf]
  %v211 = vld [vmem:[%s2 + $0x2c] sm:$0xf]
  %v212 = vld [vmem:[%s2 + $0x30] sm:$0xf]
  %v213 = vld [vmem:[%s2 + $0x34] sm:$0xf]
  %v214 = vld [vmem:[%s2 + $0x38] sm:$0xf]
  %v215 = vld [vmem:[%s2 + $0x3c] sm:$0xf]
  %v216 = vld [vmem:[%s6 + $0x3] sm:$0x1]
  %v217 = vlaneseq
  %v218 = vshrl.u32 %v217, 7
  %v219 = vsub.s32 0, %v218
  %v220 = vrot.slane %v216, %v219
  %v237 = vunpack.c.l.b16 %v200
  %v238 = vunpack.c.l.b16 %v201
  %v239 = vunpack.c.l.b16 %v202
  %v240 = vunpack.c.l.b16 %v203
  %v241 = vunpack.c.l.b16 %v204
  %v242 = vunpack.c.l.b16 %v205
  %v243 = vunpack.c.l.b16 %v206
  %v244 = vunpack.c.l.b16 %v207
  %v245 = vunpack.c.l.b16 %v208
  %v246 = vunpack.c.l.b16 %v209
  %v247 = vunpack.c.l.b16 %v210
  %v248 = vunpack.c.l.b16 %v211
  %v249 = vunpack.c.l.b16 %v212
  %v250 = vunpack.c.l.b16 %v213
  %v251 = vunpack.c.l.b16 %v214
  %v252 = vunpack.c.l.b16 %v215
  %v253 = vpack.c.b16 %v238, %v237
  %v254 = vpack.c.b16 %v240, %v239
  %v255 = vpack.c.b16 %v242, %v241
  %v256 = vpack.c.b16 %v244, %v243
  %v257 = vpack.c.b16 %v246, %v245
  %v258 = vpack.c.b16 %v248, %v247
  %v259 = vpack.c.b16 %v250, %v249
  %v260 = vpack.c.b16 %v252, %v251
  %269 = vmatprep.subr.bf16.mxu0 0
  %270 = vmatpush1.bf16.msra.mxu0 %v253
  %271 = vmatprep.subr.bf16.mxu0 0
  %272 = vmatpush1.bf16.msra.mxu0 %v254
  %273 = vmatprep.subr.bf16.mxu0 0
  %274 = vmatpush1.bf16.msra.mxu0 %v255
  %275 = vmatprep.subr.bf16.mxu0 0
  %276 = vmatpush1.bf16.msra.mxu0 %v256
  %277 = vmatprep.subr.bf16.mxu0 0
  %278 = vmatpush1.bf16.msra.mxu0 %v257
  %279 = vmatprep.subr.bf16.mxu0 0
  %280 = vmatpush1.bf16.msra.mxu0 %v258
  %281 = vmatprep.subr.bf16.mxu0 0
  %282 = vmatpush1.bf16.msra.mxu0 %v259
  %283 = vmatprep.subr.bf16.mxu0 0
  %284 = vmatpush1.bf16.msra.mxu0 %v260
  %285 = vmatprep.subr.bf16.mxu0 0
  %286 = vmatpush1.bf16.msra.mxu0 0
  %287 = vmatprep.subr.bf16.mxu0 0
  %288 = vmatpush1.bf16.msra.mxu0 0
  %289 = vmatprep.subr.bf16.mxu0 0
  %290 = vmatpush1.bf16.msra.mxu0 0
  %291 = vmatprep.subr.bf16.mxu0 0
  %292 = vmatpush1.bf16.msra.mxu0 0
  %293 = vmatprep.subr.bf16.mxu0 0
  %294 = vmatpush1.bf16.msra.mxu0 0
  %295 = vmatprep.subr.bf16.mxu0 0
  %296 = vmatpush1.bf16.msra.mxu0 0
  %297 = vmatprep.subr.bf16.mxu0 0
  %298 = vmatpush1.bf16.msra.mxu0 0
  %299 = vmatprep.subr.bf16.mxu0 0
  %300 = vmatpush1.bf16.msra.mxu0 0
  %301 = vmatprep.mubr.bf16.mxu0 0
  %302 = vmatmul.mubr.bf16.gmra.mrb[0].mxu0 %v199
  %v303 = vpop.f32.mrb[0].mxu0
  %v304 = vadd.f32 %v220, %v303
  %v305 = vpop.f32.mrb[0].mxu0
  %v306 = vpop.f32.mrb[0].mxu0
  %v307 = vpop.f32.mrb[0].mxu0
  %308 = vdwg.mxu0
  %v309 = vld [vmem:[%s6 + $0x4] sm:$0x1]
  %v310 = vld [vmem:[%s6 + $0x5] sm:$0x1]
  %vm311 = vcmp.lt.s32.totalorder %v154, 32
  %v312 = vsel %vm311, 1, 0
  %v313 = vcvt.s32.f32 %v312
  %v314 = vsub.f32 1.0, %v313
  %v315 = vmul.f32 %v304, %v313
  %vm316 = vcmask 523264
  %v317 = vsel %vm316, %v315, 0.0
  %318 = vadd.xlane.f32.xlu0 %v317
  %v319 = vpop.xlane.xlu0 %318
  %v320 = vmul.f32 %v319, 0.03125
  %v321 = vmul.f32 %v304, %v314
  %v322 = vsel %vm316, %v321, 0.0
  %323 = vadd.xlane.f32.xlu0 %v322
  %v324 = vpop.xlane.xlu0 %323
  %v325 = vmul.f32 %v324, 0.03125
  %v326 = vmul.f32 %v320, %v313
  %v327 = vmul.f32 %v325, %v314
  %v328 = vadd.f32 %v326, %v327
  %v329 = vsub.f32 %v304, %v328
  %v330 = vmul.f32 %v329, %v329
  %v331 = vmul.f32 %v330, %v313
  %v332 = vsel %vm316, %v331, 0.0
  %333 = vadd.xlane.f32.xlu0 %v332
  %v334 = vpop.xlane.xlu0 %333
  %v335 = vmul.f32 %v334, 0.03125
  %v336 = vmul.f32 %v330, %v314
  %v337 = vsel %vm316, %v336, 0.0
  %338 = vadd.xlane.f32.xlu0 %v337
  %v339 = vpop.xlane.xlu0 %338
  %v340 = vmul.f32 %v339, 0.03125
  %v341 = vadd.f32 %v335, 1e-05
  %v342 = vrsqrt.pop %v341
  %v343 = vmul.f32 %v342, %v313
  %v344 = vadd.f32 %v340, 1e-05
  %v345 = vrsqrt.pop %v344
  %v346 = vmul.f32 %v345, %v314
  %v347 = vadd.f32 %v343, %v346
  %v348 = vmul.f32 %v329, %v347
  %v349 = vlaneseq
  %v350 = vshrl.u32 %v349, 7
  %v351 = vsub.s32 0, %v350
  %v352 = vrot.slane %v309, %v351
  %v353 = vmul.f32 %v348, %v352
  %v354 = vlaneseq
  %v355 = vshrl.u32 %v354, 7
  %v356 = vsub.s32 0, %v355
  %v357 = vrot.slane %v310, %v356
  %v358 = vadd.f32 %v353, %v357
  %v359 = vmax.f32 %v358, 0.0
  %v360 = vpack.c.bf16 %v359, %v359
  %v361 = vld [vmem:[%s3] sm:$0xf]
  %v362 = vld [vmem:[%s3 + $0x4] sm:$0xf]
  %v363 = vld [vmem:[%s3 + $0x8] sm:$0xf]
  %v364 = vld [vmem:[%s3 + $0xc] sm:$0xf]
  %v365 = vld [vmem:[%s3 + $0x10] sm:$0xf]
  %v366 = vld [vmem:[%s3 + $0x14] sm:$0xf]
  %v367 = vld [vmem:[%s3 + $0x18] sm:$0xf]
  %v368 = vld [vmem:[%s3 + $0x1c] sm:$0xf]
  %v369 = vld [vmem:[%s6 + $0x6] sm:$0x1]
  %v370 = vlaneseq
  %v371 = vshrl.u32 %v370, 7
  %v372 = vsub.s32 0, %v371
  %v373 = vrot.slane %v369, %v372
  %v382 = vunpack.c.l.b16 %v361
  %v383 = vunpack.c.l.b16 %v362
  %v384 = vunpack.c.l.b16 %v363
  %v385 = vunpack.c.l.b16 %v364
  %v386 = vunpack.c.l.b16 %v365
  %v387 = vunpack.c.l.b16 %v366
  %v388 = vunpack.c.l.b16 %v367
  %v389 = vunpack.c.l.b16 %v368
  %v390 = vpack.c.b16 %v383, %v382
  %v391 = vpack.c.b16 %v385, %v384
  %v392 = vpack.c.b16 %v387, %v386
  %v393 = vpack.c.b16 %v389, %v388
  %v399 = vsel %vm316, %v360, 0
  %401 = vmatprep.subr.bf16.mxu0 0
  %402 = vmatpush1.bf16.msra.mxu0 %v390
  %403 = vmatprep.subr.bf16.mxu0 0
  %404 = vmatpush1.bf16.msra.mxu0 %v391
  %405 = vmatprep.subr.bf16.mxu0 0
  %406 = vmatpush1.bf16.msra.mxu0 %v392
  %407 = vmatprep.subr.bf16.mxu0 0
  %408 = vmatpush1.bf16.msra.mxu0 %v393
  %409 = vmatprep.subr.bf16.mxu0 0
  %410 = vmatpush1.bf16.msra.mxu0 0
  %411 = vmatprep.subr.bf16.mxu0 0
  %412 = vmatpush1.bf16.msra.mxu0 0
  %413 = vmatprep.subr.bf16.mxu0 0
  %414 = vmatpush1.bf16.msra.mxu0 0
  %415 = vmatprep.subr.bf16.mxu0 0
  %416 = vmatpush1.bf16.msra.mxu0 0
  %417 = vmatprep.subr.bf16.mxu0 0
  %418 = vmatpush1.bf16.msra.mxu0 0
  %419 = vmatprep.subr.bf16.mxu0 0
  %420 = vmatpush1.bf16.msra.mxu0 0
  %421 = vmatprep.subr.bf16.mxu0 0
  %422 = vmatpush1.bf16.msra.mxu0 0
  %423 = vmatprep.subr.bf16.mxu0 0
  %424 = vmatpush1.bf16.msra.mxu0 0
  %425 = vmatprep.subr.bf16.mxu0 0
  %426 = vmatpush1.bf16.msra.mxu0 0
  %427 = vmatprep.subr.bf16.mxu0 0
  %428 = vmatpush1.bf16.msra.mxu0 0
  %429 = vmatprep.subr.bf16.mxu0 0
  %430 = vmatpush1.bf16.msra.mxu0 0
  %431 = vmatprep.subr.bf16.mxu0 0
  %432 = vmatpush1.bf16.msra.mxu0 0
  %433 = vmatprep.mubr.bf16.mxu0 0
  %434 = vmatmul.mubr.bf16.gmra.mrb[0].mxu0 %v399
  %v435 = vpop.f32.mrb[0].mxu0
  %v436 = vadd.f32 %v373, %v435
  %v437 = vpop.f32.mrb[0].mxu0
  %v438 = vpop.f32.mrb[0].mxu0
  %v439 = vpop.f32.mrb[0].mxu0
  %440 = vdwg.mxu0
  %v441 = vmul.f32 %v436, %v436
  %v442 = vmul.f32 %v441, %v157
  %443 = vadd.xlane.f32.xlu0 %v442
  %v444 = vpop.xlane.xlu0 %443
  %v445 = vmul.f32 %v441, %v158
  %446 = vadd.xlane.f32.xlu0 %v445
  %v447 = vpop.xlane.xlu0 %446
  %v448 = vmax.f32 %v444, 1e-24
  %v449 = vrsqrt.pop %v448
  %v450 = vmul.f32 %v449, %v157
  %v451 = vmax.f32 %v447, 1e-24
  %v452 = vrsqrt.pop %v451
  %v453 = vmul.f32 %v452, %v158
  %v454 = vadd.f32 %v450, %v453
  %v455 = vmul.f32 %v436, %v454
  %v456 = vpack.c.bf16 %v455, %v455
  %v457 = vld [vmem:[%s4] sm:$0xf]
  %v458 = vld [vmem:[%s4 + $0x4] sm:$0xf]
  %v459 = vld [vmem:[%s4 + $0x8] sm:$0xf]
  %v460 = vld [vmem:[%s4 + $0xc] sm:$0xf]
  %v461 = vld [vmem:[%s4 + $0x10] sm:$0xf]
  %v462 = vld [vmem:[%s4 + $0x14] sm:$0xf]
  %v463 = vld [vmem:[%s4 + $0x18] sm:$0xf]
  %v464 = vld [vmem:[%s4 + $0x1c] sm:$0xf]
  %v465 = vld [vmem:[%s4 + $0x20] sm:$0xf]
  %v466 = vld [vmem:[%s4 + $0x24] sm:$0xf]
  %v467 = vld [vmem:[%s4 + $0x28] sm:$0xf]
  %v468 = vld [vmem:[%s4 + $0x2c] sm:$0xf]
  %v469 = vld [vmem:[%s4 + $0x30] sm:$0xf]
  %v470 = vld [vmem:[%s4 + $0x34] sm:$0xf]
  %v471 = vld [vmem:[%s4 + $0x38] sm:$0xf]
  %v472 = vld [vmem:[%s4 + $0x3c] sm:$0xf]
  %v489 = vunpack.c.l.b16 %v457
  %v490 = vunpack.c.l.b16 %v458
  %v491 = vunpack.c.l.b16 %v459
  %v492 = vunpack.c.l.b16 %v460
  %v493 = vunpack.c.l.b16 %v461
  %v494 = vunpack.c.l.b16 %v462
  %v495 = vunpack.c.l.b16 %v463
  %v496 = vunpack.c.l.b16 %v464
  %v497 = vunpack.c.l.b16 %v465
  %v498 = vunpack.c.l.b16 %v466
  %v499 = vunpack.c.l.b16 %v467
  %v500 = vunpack.c.l.b16 %v468
  %v501 = vunpack.c.l.b16 %v469
  %v502 = vunpack.c.l.b16 %v470
  %v503 = vunpack.c.l.b16 %v471
  %v504 = vunpack.c.l.b16 %v472
  %v505 = vpack.c.b16 %v490, %v489
  %v506 = vpack.c.b16 %v492, %v491
  %v507 = vpack.c.b16 %v494, %v493
  %v508 = vpack.c.b16 %v496, %v495
  %v509 = vpack.c.b16 %v498, %v497
  %v510 = vpack.c.b16 %v500, %v499
  %v511 = vpack.c.b16 %v502, %v501
  %v512 = vpack.c.b16 %v504, %v503
  %521 = vmatprep.subr.bf16.mxu0 0
  %522 = vmatpush1.bf16.msra.mxu0 %v505
  %523 = vmatprep.subr.bf16.mxu0 0
  %524 = vmatpush1.bf16.msra.mxu0 %v506
  %525 = vmatprep.subr.bf16.mxu0 0
  %526 = vmatpush1.bf16.msra.mxu0 %v507
  %527 = vmatprep.subr.bf16.mxu0 0
  %528 = vmatpush1.bf16.msra.mxu0 %v508
  %529 = vmatprep.subr.bf16.mxu0 0
  %530 = vmatpush1.bf16.msra.mxu0 %v509
  %531 = vmatprep.subr.bf16.mxu0 0
  %532 = vmatpush1.bf16.msra.mxu0 %v510
  %533 = vmatprep.subr.bf16.mxu0 0
  %534 = vmatpush1.bf16.msra.mxu0 %v511
  %535 = vmatprep.subr.bf16.mxu0 0
  %536 = vmatpush1.bf16.msra.mxu0 %v512
  %537 = vmatprep.subr.bf16.mxu0 0
  %538 = vmatpush1.bf16.msra.mxu0 0
  %539 = vmatprep.subr.bf16.mxu0 0
  %540 = vmatpush1.bf16.msra.mxu0 0
  %541 = vmatprep.subr.bf16.mxu0 0
  %542 = vmatpush1.bf16.msra.mxu0 0
  %543 = vmatprep.subr.bf16.mxu0 0
  %544 = vmatpush1.bf16.msra.mxu0 0
  %545 = vmatprep.subr.bf16.mxu0 0
  %546 = vmatpush1.bf16.msra.mxu0 0
  %547 = vmatprep.subr.bf16.mxu0 0
  %548 = vmatpush1.bf16.msra.mxu0 0
  %549 = vmatprep.subr.bf16.mxu0 0
  %550 = vmatpush1.bf16.msra.mxu0 0
  %551 = vmatprep.subr.bf16.mxu0 0
  %552 = vmatpush1.bf16.msra.mxu0 0
  %553 = vmatprep.mubr.bf16.mxu0 0
  %554 = vmatmul.mubr.bf16.gmra.mrb[0].mxu0 %v456
  %v555 = vpop.f32.mrb[0].mxu0
  %v556 = vadd.f32 %v141, %v555
  %v557 = vpop.f32.mrb[0].mxu0
  %v558 = vpop.f32.mrb[0].mxu0
  %v559 = vpop.f32.mrb[0].mxu0
  %560 = vdwg.mxu0
  %v561 = vld [vmem:[%s6 + $0x7] sm:$0x1]
  %v562 = vlaneseq
  %v563 = vshrl.u32 %v562, 7
  %v564 = vsub.s32 0, %v563
  %v565 = vrot.slane %v561, %v564
  %v566 = vadd.f32 %v556, %v565
  %v567 = vmax.f32 %v566, 0.0
  %v568 = vpack.c.bf16 %v567, %v567
  %v569 = vld [vmem:[%s5] sm:$0xf]
  %v570 = vld [vmem:[%s5 + $0x4] sm:$0xf]
  %v571 = vld [vmem:[%s5 + $0x8] sm:$0xf]
  %v572 = vld [vmem:[%s5 + $0xc] sm:$0xf]
  %v573 = vld [vmem:[%s5 + $0x10] sm:$0xf]
  %v574 = vld [vmem:[%s5 + $0x14] sm:$0xf]
  %v575 = vld [vmem:[%s5 + $0x18] sm:$0xf]
  %v576 = vld [vmem:[%s5 + $0x1c] sm:$0xf]
  %v577 = vld [vmem:[%s6 + $0x8] sm:$0x1]
  %v578 = vlaneseq
  %v579 = vshrl.u32 %v578, 7
  %v580 = vsub.s32 0, %v579
  %v581 = vrot.slane %v577, %v580
  %v590 = vunpack.c.l.b16 %v569
  %v591 = vunpack.c.l.b16 %v570
  %v592 = vunpack.c.l.b16 %v571
  %v593 = vunpack.c.l.b16 %v572
  %v594 = vunpack.c.l.b16 %v573
  %v595 = vunpack.c.l.b16 %v574
  %v596 = vunpack.c.l.b16 %v575
  %v597 = vunpack.c.l.b16 %v576
  %v598 = vpack.c.b16 %v591, %v590
  %v599 = vpack.c.b16 %v593, %v592
  %v600 = vpack.c.b16 %v595, %v594
  %v601 = vpack.c.b16 %v597, %v596
  %v607 = vsel %vm316, %v568, 0
  %609 = vmatprep.subr.bf16.mxu0 0
  %610 = vmatpush1.bf16.msra.mxu0 %v598
  %611 = vmatprep.subr.bf16.mxu0 0
  %612 = vmatpush1.bf16.msra.mxu0 %v599
  %613 = vmatprep.subr.bf16.mxu0 0
  %614 = vmatpush1.bf16.msra.mxu0 %v600
  %615 = vmatprep.subr.bf16.mxu0 0
  %616 = vmatpush1.bf16.msra.mxu0 %v601
  %617 = vmatprep.subr.bf16.mxu0 0
  %618 = vmatpush1.bf16.msra.mxu0 0
  %619 = vmatprep.subr.bf16.mxu0 0
  %620 = vmatpush1.bf16.msra.mxu0 0
  %621 = vmatprep.subr.bf16.mxu0 0
  %622 = vmatpush1.bf16.msra.mxu0 0
  %623 = vmatprep.subr.bf16.mxu0 0
  %624 = vmatpush1.bf16.msra.mxu0 0
  %625 = vmatprep.subr.bf16.mxu0 0
  %626 = vmatpush1.bf16.msra.mxu0 0
  %627 = vmatprep.subr.bf16.mxu0 0
  %628 = vmatpush1.bf16.msra.mxu0 0
  %629 = vmatprep.subr.bf16.mxu0 0
  %630 = vmatpush1.bf16.msra.mxu0 0
  %631 = vmatprep.subr.bf16.mxu0 0
  %632 = vmatpush1.bf16.msra.mxu0 0
  %633 = vmatprep.subr.bf16.mxu0 0
  %634 = vmatpush1.bf16.msra.mxu0 0
  %635 = vmatprep.subr.bf16.mxu0 0
  %636 = vmatpush1.bf16.msra.mxu0 0
  %637 = vmatprep.subr.bf16.mxu0 0
  %638 = vmatpush1.bf16.msra.mxu0 0
  %639 = vmatprep.subr.bf16.mxu0 0
  %640 = vmatpush1.bf16.msra.mxu0 0
  %641 = vmatprep.mubr.bf16.mxu0 0
  %642 = vmatmul.mubr.bf16.gmra.mrb[0].mxu0 %v607
  %v643 = vpop.f32.mrb[0].mxu0
  %v644 = vadd.f32 %v581, %v643
  %v645 = vpop.f32.mrb[0].mxu0
  %v646 = vpop.f32.mrb[0].mxu0
  %v647 = vpop.f32.mrb[0].mxu0
  %648 = vdwg.mxu0
  %v649 = vmax.f32 %v644, 0.0
  %v650 = vld [vmem:[%s6 + $0x9] sm:$0x1]
  %v651 = vlaneseq
  %v652 = vshrl.u32 %v651, 7
  %v653 = vsub.s32 0, %v652
  %v654 = vrot.slane %v650, %v653
  %v655 = vmul.f32 %v649, %v654
  %vm656 = vcmask 261120
  %v657 = vsel %vm656, %v655, 0.0
  %658 = vadd.xlane.f32.xlu0 %v657
  %v659 = vpop.xlane.xlu0 %658
  %v660 = vld [vmem:[%s6 + $0xa] sm:$0x1]
  %v661 = vlaneseq
  %v662 = vshrl.u32 %v661, 7
  %v663 = vsub.s32 0, %v662
  %v664 = vrot.slane %v660, %v663
  %v665 = vadd.f32 %v659, %v664
  %vm666 = vcmask 7168
  %667 = vst.msk [vmem:[%s7] sm:$0xff] %vm666, %v665
  // Predicated region
  $region30: #{tpu_custom_call.1} parent=0 // pred_check
    _
  $region31: #{tpu_custom_call.1} parent=0 // pred_check_branch
    %669 = sbr.rel (0) target = $region33
  $region32: #{tpu_custom_call.1} parent=0 // pred_region
    _
  $region33: #{tpu_custom_call.1} parent=0 // pred_fallthru
    _
  // Predicated region
  $region34: #{tpu_custom_call.1} parent=0 // pred_check
    _
  $region35: #{tpu_custom_call.1} parent=0 // pred_check_branch
    %671 = sbr.rel (0) target = $region37
  $region36: #{tpu_custom_call.1} parent=0 // pred_region
    _
  $region37: #{tpu_custom_call.1} parent=0 // pred_fallthru
    _

</llo_original>
